<compile_context>
chip_gen: v7x
topology: tpu7x:2x2x1
jax: 0.10.0
libtpu: 0.0.40
codegen_flags: <defaults>
</compile_context>

<pallas_src>
import jax
import jax.numpy as jnp
from jax import lax
from jax.experimental import pallas as pl
from jax.experimental.pallas import tpu as pltpu

EPS = 1e-5


def _add_norm_kernel(x1_ref, x2_ref, w_ref, b_ref, o_ref):
    # x1/x2/o blocks: (BT, S, TE); w/b blocks: (1, 1, TE), already f32.
    added = (x1_ref[...] + x2_ref[...]).astype(jnp.float32)

    # InstanceNorm statistics over the sequence axis (axis=1), biased variance.
    mean = jnp.mean(added, axis=1, keepdims=True)                 # (BT, 1, TE)
    centered = added - mean
    var = jnp.mean(centered * centered, axis=1, keepdims=True)    # (BT, 1, TE)
    inv_std = lax.rsqrt(var + EPS)                                # (BT, 1, TE)

    # Fold the per-channel affine into one scale/shift -> 1 mul + 1 add per element.
    scale = inv_std * w_ref[...]                                  # (BT, 1, TE)
    shift = b_ref[...] - mean * scale                             # (BT, 1, TE)

    o_ref[...] = (added * scale + shift).astype(o_ref.dtype)


def add_and_normalize(x1, x2, weight, bias, *, tile_budget_bytes=24 << 20):
    """x1, x2: (B, S, E); weight, bias: (E,). Returns (B, S, E) in x1.dtype."""
    B, S, E = x1.shape
    assert x2.shape == (B, S, E)
    dtype_bytes = jnp.dtype(x1.dtype).itemsize

    # ---- Channel tile TE.  Never tile S: the reduction needs the whole sequence axis. ----
    # Budget counts 3 streams (x1, x2, out) double-buffered => ~6x a single tile.
    if (6 * S * E * dtype_bytes) <= tile_budget_bytes or (E % 128) != 0:
        TE = E
    else:
        TE = 128
        while (TE * 2 <= E and E % (TE * 2) == 0
               and 6 * S * (TE * 2) * dtype_bytes <= tile_budget_bytes):
            TE *= 2
    # TODO(synk): if E is not a multiple of 128 AND a single (1, S, E) tile still exceeds
    # VMEM, a two-pass (stats pass + apply pass) kernel over S-tiles would be needed.
    n_e = pl.cdiv(E, TE)

    # ---- Batch tile BT: pack as many batches as fit in the VMEM budget. ----
    per_batch_bytes = 6 * S * TE * dtype_bytes
    BT = int(max(1, tile_budget_bytes // per_batch_bytes))
    BT = int(min(BT, B))
    # Keep at least 2 grid steps when B > 1 so both TensorCores stay busy (megacore / v7x).
    if B > 1 and pl.cdiv(B, BT) * n_e < 2:
        BT = int(pl.cdiv(B, 2))
    n_b = pl.cdiv(B, BT)

    # ---- Explicit scoped-VMEM limit derived from the tile choice (capped for v7x). ----
    tile_bytes = BT * S * TE * dtype_bytes
    wb_bytes = 2 * TE * 4
    vmem_needed = 2 * (3 * tile_bytes + 2 * wb_bytes)     # double-buffered
    vmem_limit = int(min(max(2 * vmem_needed, 32 << 20), 64 << 20))

    # Weight / bias as (1, 1, E) f32 so they broadcast directly against (BT, S, TE) blocks.
    w3 = weight.reshape(1, 1, E).astype(jnp.float32)
    b3 = bias.reshape(1, 1, E).astype(jnp.float32)

    x_spec = pl.BlockSpec((BT, S, TE), lambda b, e: (b, 0, e))
    wb_spec = pl.BlockSpec((1, 1, TE), lambda b, e: (0, 0, e))

    return pl.pallas_call(
        _add_norm_kernel,
        out_shape=jax.ShapeDtypeStruct((B, S, E), x1.dtype),
        grid_spec=pl.GridSpec(
            grid=(n_b, n_e),
            in_specs=[x_spec, x_spec, wb_spec, wb_spec],
            out_specs=pl.BlockSpec((BT, S, TE), lambda b, e: (b, 0, e)),
        ),
        compiler_params=pltpu.CompilerParams(
            dimension_semantics=("parallel", "parallel"),
            vmem_limit_bytes=vmem_limit,
        ),
    )(x1, x2, w3, b3)


def reference(x1, x2, weight, bias):
    added = (x1 + x2).astype(jnp.float32)
    mean = jnp.mean(added, axis=1, keepdims=True)
    var = jnp.mean((added - mean) ** 2, axis=1, keepdims=True)
    normed = (added - mean) / jnp.sqrt(var + EPS)
    out = normed * weight[None, None, :] + bias[None, None, :]
    return out.astype(x1.dtype)


if __name__ == "__main__":
    B, S, E = 2, 8, 32  # batch, seq, embedding_dim

    key = jax.random.PRNGKey(0)
    k1, k2, kw, kb = jax.random.split(key, 4)
    x1 = jax.random.normal(k1, (B, S, E), dtype=jnp.float32)
    x2 = jax.random.normal(k2, (B, S, E), dtype=jnp.float32)

    # InstanceNorm1d default init is w=1, b=0; perturb deterministically to exercise affine.
    weight = jnp.ones((E,), dtype=jnp.float32) + 0.1 * jax.random.normal(kw, (E,), dtype=jnp.float32)
    bias = 0.1 * jax.random.normal(kb, (E,), dtype=jnp.float32)

    out = add_and_normalize(x1, x2, weight, bias)
    out = jax.block_until_ready(out)

    ref = reference(x1, x2, weight, bias)
    assert out.shape == (B, S, E)
    assert jnp.allclose(out, ref, atol=1e-5, rtol=1e-5)

    print("KERNEL_OK")
</pallas_src>

<mosaic_0001>
module attributes {stable_mosaic.version = 11 : i64} {
  func.func @_add_norm_kernel(%arg0: i32, %arg1: i32, %arg2: memref<1x8x32xf32, #tpu.memory_space<vmem>>, %arg3: memref<1x8x32xf32, #tpu.memory_space<vmem>>, %arg4: memref<1x1x32xf32, #tpu.memory_space<vmem>>, %arg5: memref<1x1x32xf32, #tpu.memory_space<vmem>>, %arg6: memref<1x8x32xf32, #tpu.memory_space<vmem>>) attributes {dimension_semantics = [#tpu.dimension_semantics<parallel>, #tpu.dimension_semantics<parallel>], iteration_bounds = array<i64: 2, 1>, scalar_prefetch = 0 : i64, scratch_operands = 0 : i64, tpu.core_type = #tpu.core_type<tc>, window_params = [{transform_indices = @transform_0, window_bounds = array<i64: 1, 8, 32>}, {transform_indices = @transform_1, window_bounds = array<i64: 1, 8, 32>}, {transform_indices = @transform_2, window_bounds = array<i64: 1, 1, 32>}, {transform_indices = @transform_3, window_bounds = array<i64: 1, 1, 32>}, {transform_indices = @transform_4, window_bounds = array<i64: 1, 8, 32>}]} {
    %c0 = arith.constant 0 : index
    %c0_0 = arith.constant 0 : index
    %c0_1 = arith.constant 0 : index
    %0 = vector.load %arg2[%c0, %c0_0, %c0_1] : memref<1x8x32xf32, #tpu.memory_space<vmem>>, vector<1x8x32xf32>
    %c0_2 = arith.constant 0 : index
    %c0_3 = arith.constant 0 : index
    %c0_4 = arith.constant 0 : index
    %1 = vector.load %arg3[%c0_2, %c0_3, %c0_4] : memref<1x8x32xf32, #tpu.memory_space<vmem>>, vector<1x8x32xf32>
    %2 = arith.addf %0, %1 : vector<1x8x32xf32>
    %cst = arith.constant dense<0.000000e+00> : vector<1x32xf32>
    %3 = vector.multi_reduction <add>, %2, %cst [1] : vector<1x8x32xf32> to vector<1x32xf32>
    %4 = vector.shape_cast %3 : vector<1x32xf32> to vector<1x1x32xf32>
    %cst_5 = arith.constant 8.000000e+00 : f32
    %5 = vector.broadcast %cst_5 : f32 to vector<1x1x32xf32>
    %6 = arith.divf %4, %5 : vector<1x1x32xf32>
    %7 = vector.broadcast %6 : vector<1x1x32xf32> to vector<1x8x32xf32>
    %8 = arith.subf %2, %7 : vector<1x8x32xf32>
    %9 = arith.mulf %8, %8 : vector<1x8x32xf32>
    %cst_6 = arith.constant dense<0.000000e+00> : vector<1x32xf32>
    %10 = vector.multi_reduction <add>, %9, %cst_6 [1] : vector<1x8x32xf32> to vector<1x32xf32>
    %11 = vector.shape_cast %10 : vector<1x32xf32> to vector<1x1x32xf32>
    %cst_7 = arith.constant 8.000000e+00 : f32
    %12 = vector.broadcast %cst_7 : f32 to vector<1x1x32xf32>
    %13 = arith.divf %11, %12 : vector<1x1x32xf32>
    %cst_8 = arith.constant 9.99999974E-6 : f32
    %14 = vector.broadcast %cst_8 : f32 to vector<1x1x32xf32>
    %15 = arith.addf %13, %14 : vector<1x1x32xf32>
    %16 = math.rsqrt %15 : vector<1x1x32xf32>
    %c0_9 = arith.constant 0 : index
    %c0_10 = arith.constant 0 : index
    %c0_11 = arith.constant 0 : index
    %17 = vector.load %arg4[%c0_9, %c0_10, %c0_11] : memref<1x1x32xf32, #tpu.memory_space<vmem>>, vector<1x1x32xf32>
    %18 = arith.mulf %16, %17 : vector<1x1x32xf32>
    %c0_12 = arith.constant 0 : index
    %c0_13 = arith.constant 0 : index
    %c0_14 = arith.constant 0 : index
    %19 = vector.load %arg5[%c0_12, %c0_13, %c0_14] : memref<1x1x32xf32, #tpu.memory_space<vmem>>, vector<1x1x32xf32>
    %20 = arith.mulf %6, %18 : vector<1x1x32xf32>
    %21 = arith.subf %19, %20 : vector<1x1x32xf32>
    %22 = vector.broadcast %18 : vector<1x1x32xf32> to vector<1x8x32xf32>
    %23 = arith.mulf %2, %22 : vector<1x8x32xf32>
    %24 = vector.broadcast %21 : vector<1x1x32xf32> to vector<1x8x32xf32>
    %25 = arith.addf %23, %24 : vector<1x8x32xf32>
    %c0_15 = arith.constant 0 : index
    %c0_16 = arith.constant 0 : index
    %c0_17 = arith.constant 0 : index
    %26 = vector.load %arg6[%c0_15, %c0_16, %c0_17] : memref<1x8x32xf32, #tpu.memory_space<vmem>>, vector<1x8x32xf32>
    tpu.vector_store %arg6[%c0_15, %c0_16, %c0_17], %25 {strides = array<i32>} : memref<1x8x32xf32, #tpu.memory_space<vmem>>, vector<1x8x32xf32>,
    return
  }
  func.func @transform_0(%arg0: i32, %arg1: i32) -> (i32, i32, i32) {
    %c0_i32 = arith.constant 0 : i32
    %c0_i32_0 = arith.constant 0 : i32
    return %arg0, %c0_i32, %arg1 : i32, i32, i32
  }
  func.func @transform_1(%arg0: i32, %arg1: i32) -> (i32, i32, i32) {
    %c0_i32 = arith.constant 0 : i32
    %c0_i32_0 = arith.constant 0 : i32
    return %arg0, %c0_i32, %arg1 : i32, i32, i32
  }
  func.func @transform_2(%arg0: i32, %arg1: i32) -> (i32, i32, i32) {
    %c0_i32 = arith.constant 0 : i32
    %c0_i32_0 = arith.constant 0 : i32
    %c0_i32_1 = arith.constant 0 : i32
    return %c0_i32, %c0_i32_0, %arg1 : i32, i32, i32
  }
  func.func @transform_3(%arg0: i32, %arg1: i32) -> (i32, i32, i32) {
    %c0_i32 = arith.constant 0 : i32
    %c0_i32_0 = arith.constant 0 : i32
    %c0_i32_1 = arith.constant 0 : i32
    return %c0_i32, %c0_i32_0, %arg1 : i32, i32, i32
  }
  func.func @transform_4(%arg0: i32, %arg1: i32) -> (i32, i32, i32) {
    %c0_i32 = arith.constant 0 : i32
    %c0_i32_0 = arith.constant 0 : i32
    return %arg0, %c0_i32, %arg1 : i32, i32, i32
  }
}

</mosaic_0001>

<llo_original>
// kernel: tpu_custom_call.1
$region0: #{tpu_custom_call.1}
  #allocation0 [shape = 'u32[]', space=smem, size = 0x4, offset = 0x4, fixed_abs, tag = 'smem constant byte address 0x4 - core index']
  #allocation1 [shape = 'u32[144,128]{1,0:T(1,128)}', space=vmem, size = 0x12000, scoped, tag = 'internal scratch']
  %s0 = inlined_call_operand.hbm [shape: f32[2,8,32], index: 0, kind: input, shape index: {}]
  %s1 = inlined_call_operand.hbm [shape: f32[2,8,32], index: 1, kind: input, shape index: {}]
  %s2 = inlined_call_operand.vmem [shape: f32[1,1,32], index: 2, kind: input, shape index: {}]
  %s3 = inlined_call_operand.vmem [shape: f32[1,1,32], index: 3, kind: input, shape index: {}]
  %s4 = inlined_call_operand.hbm [shape: f32[2,8,32], index: 4, kind: output, shape index: {}]
  %s5 = sld [smem:[#allocation0]]
  $region57: #{tpu_custom_call.1} parent=0
    _
  %s7 = ssub.s32 1, %s5
  %s8 = scalar_select 0, %s7, %s5
  $region1: #{tpu_custom_call.1} parent=0
    #allocation2 [shape = 'u8[8192]{0}', space=vmem, size = 0x2000, scoped, tag = 'input window, operand 0']
    #allocation3 [shape = 's32[2]{0}', space=sflag, size = 0x8, scoped, tag = 'scoped memory for tpu_custom_call.1']
    #allocation4 [shape = 's32[2]{0}', space=sflag, size = 0x8, scoped, tag = 'scoped memory for tpu_custom_call.1']
    #allocation5 [shape = 'u8[8192]{0}', space=vmem, size = 0x2000, scoped, tag = 'input window, operand 1']
    #allocation6 [shape = 's32[2]{0}', space=sflag, size = 0x8, scoped, tag = 'scoped memory for tpu_custom_call.1']
    #allocation7 [shape = 'u8[8192]{0}', space=vmem, size = 0x2000, scoped, tag = 'output window, operand 0']
    %9 = vsyncpa [#allocation3], 0
    %s10 = scalar_lea.sflag [#allocation3], 1
    %11 = vsyncpa %s10, 0
    %12 = vsyncpa [#allocation6], 0
    %s13 = scalar_lea.sflag [#allocation6], 1
    %14 = vsyncpa %s13, 0
    %15 = vsyncpa [#allocation4], 0
    %s16 = scalar_lea.sflag [#allocation4], 1
    %17 = vsyncpa %s16, 0
    loop: start=0, step=1, limit=4
    $region2: #{tpu_custom_call.1} parent=1 // loop_pre_header
      _
    $region3: #{tpu_custom_call.1} parent=1 // loop_header
      %s19 = sphi 0, %s23
      %p20 = scmp.ge.s32.totalorder %s19, 4
      %s26 = sphi 0, %s38
      %s27 = sphi 0, %s34
      %s28 = sphi 0, %s26
      %s29 = sphi 0, %s27
      %s30 = sphi 0, %s28
      %s31 = sphi 0, %s29
      %s43 = sphi 0, %s45
      %s46 = sphi 0, %s43
      %s47 = sphi 0, %s46
      %s63 = sphi 0, %s47
      %s71 = sphi 0, %s73
      %s74 = sphi 0, %s71
      %s75 = sphi 0, %s74
      %s91 = sphi 0, %s75
      %s97 = sphi 0, %s99
      %s100 = sphi 0, %s97
      %s101 = sphi 0, %s100
      %s117 = sphi 0, %s101
      %s123 = sphi 0, %s125
      %s126 = sphi 0, %s123
      %s127 = sphi 0, %s126
      %s143 = sphi 0, %s127
      %s151 = sphi 0, %s153
      %s154 = sphi 0, %s151
      %s155 = sphi 0, %s154
      %s171 = sphi 0, %s155
    $region4: #{tpu_custom_call.1} parent=1 // loop_header_branch
      %22 = sbr.rel (%p20) target = $region8
    $region5: #{tpu_custom_call.1} parent=1 // loop_body
      %s24 = ssub.s32 %s19, 1
      %s25 = ssub.s32 %s19, 2
      %s32 = sadd.s32 1, %s27
      %p33 = scmp.ge.s32.totalorder %s32, 1
      %s34 = scalar_select %p33, 0, %s32
      %s35 = sadd.s32 1, %s26
      %s36 = scalar_select %p33, %s35, %s26
      %p37 = scmp.ge.s32.totalorder %s36, 2
      %s38 = scalar_select %p37, 0, %s36
      %s39 = ssub.s32 %s26, %s38
      %s40 = ssub.s32 %s27, %s34
      %s41 = sor.u32 %s39, %s40
      %p42 = scmp.eq.s32.totalorder %s41, 0
      %s44 = sadd.s32 %s43, 1
      %s45 = scalar_select %p42, %s43, %s44
      %p48 = pneg %p42
      %p49 = scmp.eq.s32.totalorder %s19, 1
      %p50 = por %p48, %p49
      %p51 = scmp.ne.s32.totalorder %s43, %s46
      %p52 = scmp.eq.s32.totalorder %s19, 0
      %p53 = por %p51, %p52
      %p54 = scmp.ne.s32.totalorder %s43, %s46
      %p55 = scmp.eq.s32.totalorder %s24, 1
      %p56 = por %p54, %p55
      %p57 = scmp.ne.s32.totalorder %s46, %s47
      %p58 = scmp.eq.s32.totalorder %s24, 0
      %p59 = por %p57, %p58
      %p60 = scmp.ne.s32.totalorder %s46, %s47
      %p61 = scmp.eq.s32.totalorder %s25, 1
      %p62 = por %p60, %p61
      %p64 = scmp.ne.s32.totalorder %s47, %s63
      %p65 = scmp.eq.s32.totalorder %s25, 0
      %p66 = por %p64, %p65
      %s67 = ssub.s32 %s26, %s38
      %s68 = ssub.s32 %s27, %s34
      %s69 = sor.u32 %s67, %s68
      %p70 = scmp.eq.s32.totalorder %s69, 0
      %s72 = sadd.s32 %s71, 1
      %s73 = scalar_select %p70, %s71, %s72
      %p76 = pneg %p70
      %p77 = scmp.eq.s32.totalorder %s19, 1
      %p78 = por %p76, %p77
      %p79 = scmp.ne.s32.totalorder %s71, %s74
      %p80 = scmp.eq.s32.totalorder %s19, 0
      %p81 = por %p79, %p80
      %p82 = scmp.ne.s32.totalorder %s71, %s74
      %p83 = scmp.eq.s32.totalorder %s24, 1
      %p84 = por %p82, %p83
      %p85 = scmp.ne.s32.totalorder %s74, %s75
      %p86 = scmp.eq.s32.totalorder %s24, 0
      %p87 = por %p85, %p86
      %p88 = scmp.ne.s32.totalorder %s74, %s75
      %p89 = scmp.eq.s32.totalorder %s25, 1
      %p90 = por %p88, %p89
      %p92 = scmp.ne.s32.totalorder %s75, %s91
      %p93 = scmp.eq.s32.totalorder %s25, 0
      %p94 = por %p92, %p93
      %s95 = ssub.s32 %s27, %s34
      %p96 = scmp.eq.s32.totalorder %s95, 0
      %s98 = sadd.s32 %s97, 1
      %s99 = scalar_select %p96, %s97, %s98
      %p102 = pneg %p96
      %p103 = scmp.eq.s32.totalorder %s19, 1
      %p104 = por %p102, %p103
      %p105 = scmp.ne.s32.totalorder %s97, %s100
      %p106 = scmp.eq.s32.totalorder %s19, 0
      %p107 = por %p105, %p106
      %p108 = scmp.ne.s32.totalorder %s97, %s100
      %p109 = scmp.eq.s32.totalorder %s24, 1
      %p110 = por %p108, %p109
      %p111 = scmp.ne.s32.totalorder %s100, %s101
      %p112 = scmp.eq.s32.totalorder %s24, 0
      %p113 = por %p111, %p112
      %p114 = scmp.ne.s32.totalorder %s100, %s101
      %p115 = scmp.eq.s32.totalorder %s25, 1
      %p116 = por %p114, %p115
      %p118 = scmp.ne.s32.totalorder %s101, %s117
      %p119 = scmp.eq.s32.totalorder %s25, 0
      %p120 = por %p118, %p119
      %s121 = ssub.s32 %s27, %s34
      %p122 = scmp.eq.s32.totalorder %s121, 0
      %s124 = sadd.s32 %s123, 1
      %s125 = scalar_select %p122, %s123, %s124
      %p128 = pneg %p122
      %p129 = scmp.eq.s32.totalorder %s19, 1
      %p130 = por %p128, %p129
      %p131 = scmp.ne.s32.totalorder %s123, %s126
      %p132 = scmp.eq.s32.totalorder %s19, 0
      %p133 = por %p131, %p132
      %p134 = scmp.ne.s32.totalorder %s123, %s126
      %p135 = scmp.eq.s32.totalorder %s24, 1
      %p136 = por %p134, %p135
      %p137 = scmp.ne.s32.totalorder %s126, %s127
      %p138 = scmp.eq.s32.totalorder %s24, 0
      %p139 = por %p137, %p138
      %p140 = scmp.ne.s32.totalorder %s126, %s127
      %p141 = scmp.eq.s32.totalorder %s25, 1
      %p142 = por %p140, %p141
      %p144 = scmp.ne.s32.totalorder %s127, %s143
      %p145 = scmp.eq.s32.totalorder %s25, 0
      %p146 = por %p144, %p145
      %s147 = ssub.s32 %s26, %s38
      %s148 = ssub.s32 %s27, %s34
      %s149 = sor.u32 %s147, %s148
      %p150 = scmp.eq.s32.totalorder %s149, 0
      %s152 = sadd.s32 %s151, 1
      %s153 = scalar_select %p150, %s151, %s152
      %p156 = pneg %p150
      %p157 = scmp.eq.s32.totalorder %s19, 1
      %p158 = por %p156, %p157
      %p159 = scmp.ne.s32.totalorder %s151, %s154
      %p160 = scmp.eq.s32.totalorder %s19, 0
      %p161 = por %p159, %p160
      %p162 = scmp.ne.s32.totalorder %s151, %s154
      %p163 = scmp.eq.s32.totalorder %s24, 1
      %p164 = por %p162, %p163
      %p165 = scmp.ne.s32.totalorder %s154, %s155
      %p166 = scmp.eq.s32.totalorder %s24, 0
      %p167 = por %p165, %p166
      %p168 = scmp.ne.s32.totalorder %s154, %s155
      %p169 = scmp.eq.s32.totalorder %s25, 1
      %p170 = por %p168, %p169
      %p172 = scmp.ne.s32.totalorder %s155, %s171
      %p173 = scmp.eq.s32.totalorder %s25, 0
      %p174 = por %p172, %p173
      %p175 = scmp.le.s32.totalorder 1, %s19
      %p176 = scmp.lt.s32.totalorder %s19, 3
      %p177 = pnand %p175, %p176
      %p178 = pneg %p177
      // Predicated region
      $region9: #{tpu_custom_call.1} parent=5 // pred_check
        _
      $region10: #{tpu_custom_call.1} parent=5 // pred_check_branch
        %180 = sbr.rel (%p177) target = $region12
      $region11: #{tpu_custom_call.1} parent=5 // pred_region
        %s181 = ssub.s32 %s19, 1
        // Predicated region
        $region13: #{tpu_custom_call.1} parent=11 // pred_check
          %p182 = pneg %p113
        $region14: #{tpu_custom_call.1} parent=11 // pred_check_branch
          %184 = sbr.rel (%p182) target = $region16
        $region15: #{tpu_custom_call.1} parent=11 // pred_region
          %p185 = scmp.lt.s32.totalorder %s29, 0
          %s186 = scalar_select %p185, %s29, 0
          %s187 = scalar_lea.vmem %s2, %s186
        $region16: #{tpu_custom_call.1} parent=11 // pred_fallthru
          _
        // Predicated region
        $region17: #{tpu_custom_call.1} parent=11 // pred_check
          %p188 = pneg %p139
        $region18: #{tpu_custom_call.1} parent=11 // pred_check_branch
          %190 = sbr.rel (%p188) target = $region20
        $region19: #{tpu_custom_call.1} parent=11 // pred_region
          %p191 = scmp.lt.s32.totalorder %s29, 0
          %s192 = scalar_select %p191, %s29, 0
          %s193 = scalar_lea.vmem %s3, %s192
        $region20: #{tpu_custom_call.1} parent=11 // pred_fallthru
          _
      $region12: #{tpu_custom_call.1} parent=5 // pred_fallthru
        _
      %p194 = scmp.lt.s32.totalorder %s19, 2
      // Predicated region
      $region21: #{tpu_custom_call.1} parent=5 // pred_check
        %p195 = pneg %p194
      $region22: #{tpu_custom_call.1} parent=5 // pred_check_branch
        %197 = sbr.rel (%p195) target = $region24
      $region23: #{tpu_custom_call.1} parent=5 // pred_region
        // Predicated region
        $region25: #{tpu_custom_call.1} parent=23 // pred_check
          %p198 = pneg %p53
        $region26: #{tpu_custom_call.1} parent=23 // pred_check_branch
          %200 = sbr.rel (%p198) target = $region28
        $region27: #{tpu_custom_call.1} parent=23 // pred_region
          %s201 = sand.u32 %s43, 1
          %s202 = scalar_lea.sflag [#allocation3], %s201
          %s203 = sand.u32 %s43, 1
          %s204 = smul.addr %s203, 8
          %s205 = scalar_lea.vmem [#allocation2], %s204
          %s207 = ssub.s32 128, 128
          %208 = vsyncadd %s202, %s207
          %s209 = sadd.s32 %s27, %s26
          %s210 = smul.addr %s209, 128
          %s211 = scalar_lea.hbm %s0, %s210
          %s213 = sshll.u32 %s205, 4
          %s214 = int_to_ptr.vmem [resolvable:$true] %s213
          %216 = dma.hbm_to_vmem [thread:$0]  %s211, 128, %s214, %s202
        $region28: #{tpu_custom_call.1} parent=23 // pred_fallthru
          _
        // Predicated region
        $region29: #{tpu_custom_call.1} parent=23 // pred_check
          %p217 = pneg %p81
        $region30: #{tpu_custom_call.1} parent=23 // pred_check_branch
          %219 = sbr.rel (%p217) target = $region32
        $region31: #{tpu_custom_call.1} parent=23 // pred_region
          %s220 = sand.u32 %s71, 1
          %s221 = scalar_lea.sflag [#allocation6], %s220
          %s222 = sand.u32 %s71, 1
          %s223 = smul.addr %s222, 8
          %s224 = scalar_lea.vmem [#allocation5], %s223
          %s226 = ssub.s32 128, 128
          %227 = vsyncadd %s221, %s226
          %s228 = sadd.s32 %s27, %s26
          %s229 = smul.addr %s228, 128
          %s230 = scalar_lea.hbm %s1, %s229
          %s232 = sshll.u32 %s224, 4
          %s233 = int_to_ptr.vmem [resolvable:$true] %s232
          %235 = dma.hbm_to_vmem [thread:$0]  %s230, 128, %s233, %s221
        $region32: #{tpu_custom_call.1} parent=23 // pred_fallthru
          _
      $region24: #{tpu_custom_call.1} parent=5 // pred_fallthru
        _
      %p236 = scmp.le.s32.totalorder 1, %s19
      %p237 = scmp.lt.s32.totalorder %s19, 3
      %p238 = pnand %p236, %p237
      %p239 = pneg %p238
      // Predicated region
      $region33: #{tpu_custom_call.1} parent=5 // pred_check
        _
      $region34: #{tpu_custom_call.1} parent=5 // pred_check_branch
        %241 = sbr.rel (%p238) target = $region36
      $region35: #{tpu_custom_call.1} parent=5 // pred_region
        %s242 = ssub.s32 %s19, 1
        %s243 = sand.u32 %s46, 1
        %s244 = scalar_lea.sflag [#allocation3], %s243
        %s245 = sand.u32 %s46, 1
        %s246 = smul.addr %s245, 8
        %s247 = scalar_lea.vmem [#allocation2], %s246
        // Predicated region
        $region37: #{tpu_custom_call.1} parent=35 // pred_check
          %p248 = pneg %p59
        $region38: #{tpu_custom_call.1} parent=35 // pred_check_branch
          %250 = sbr.rel (%p248) target = $region40
        $region39: #{tpu_custom_call.1} parent=35 // pred_region
          %251 = dma.done %s244, 128
        $region40: #{tpu_custom_call.1} parent=35 // pred_fallthru
          _
        %s252 = sand.u32 %s74, 1
        %s253 = scalar_lea.sflag [#allocation6], %s252
        %s254 = sand.u32 %s74, 1
        %s255 = smul.addr %s254, 8
        %s256 = scalar_lea.vmem [#allocation5], %s255
        // Predicated region
        $region41: #{tpu_custom_call.1} parent=35 // pred_check
          %p257 = pneg %p87
        $region42: #{tpu_custom_call.1} parent=35 // pred_check_branch
          %259 = sbr.rel (%p257) target = $region44
        $region43: #{tpu_custom_call.1} parent=35 // pred_region
          %260 = dma.done %s253, 128
        $region44: #{tpu_custom_call.1} parent=35 // pred_fallthru
          _
        %s261 = sand.u32 %s46, 1
        %s262 = scalar_lea.sflag [#allocation3], %s261
        %s263 = sand.u32 %s46, 1
        %s264 = smul.addr %s263, 8
        %s265 = scalar_lea.vmem [#allocation2], %s264
        %p266 = pneg %p59
        %p267 = pneg %p56
        %s268 = sand.u32 %s74, 1
        %s269 = scalar_lea.sflag [#allocation6], %s268
        %s270 = sand.u32 %s74, 1
        %s271 = smul.addr %s270, 8
        %s272 = scalar_lea.vmem [#allocation5], %s271
        %p273 = pneg %p87
        %p274 = pneg %p84
        %p275 = scmp.lt.s32.totalorder %s29, 0
        %s276 = scalar_select %p275, %s29, 0
        %s277 = scalar_lea.vmem %s2, %s276
        %p278 = pneg %p113
        %p279 = pneg %p110
        %p280 = scmp.lt.s32.totalorder %s29, 0
        %s281 = scalar_select %p280, %s29, 0
        %s282 = scalar_lea.vmem %s3, %s281
        %p283 = pneg %p139
        %p284 = pneg %p136
        %p285 = pneg %p167
        %p286 = pneg %p164
        %s287 = sand.u32 %s154, 1
        %s288 = scalar_lea.sflag [#allocation4], %s287
        %s289 = sand.u32 %s154, 1
        %s290 = smul.addr %s289, 8
        %s291 = scalar_lea.vmem [#allocation7], %s290
        %p292 = scmp.lt.s32.totalorder %s29, 0
        %s293 = scalar_select %p292, %s29, 0
        %s294 = scalar_lea.vmem %s2, %s293
        %p295 = scmp.lt.s32.totalorder %s29, 0
        %s296 = scalar_select %p295, %s29, 0
        %s297 = scalar_lea.vmem %s3, %s296
        %v298 = vld [vmem:[%s247] sm:$0xff]
        %v299 = vld [vmem:[%s256] sm:$0xff]
        %v300 = vadd.f32 %v298, %v299
        %vm301 = vcmask 261120
        %v302 = vsel %vm301, %v300, 0.0
        %v303 = vrot.slane %v302, 4
        %v304 = vadd.f32 %v302, %v303
        %v305 = vrot.slane %v304, 2
        %v306 = vadd.f32 %v304, %v305
        %v307 = vrot.slane %v306, 1
        %v308 = vadd.f32 %v306, %v307
        %v309 = vrcp.pop 8.0
        %v310 = vmul.f32 %v308, %v309
        %v311 = vsub.f32 %v300, %v310
        %v312 = vmul.f32 %v311, %v311
        %v313 = vsel %vm301, %v312, 0.0
        %v314 = vrot.slane %v313, 4
        %v315 = vadd.f32 %v313, %v314
        %v316 = vrot.slane %v315, 2
        %v317 = vadd.f32 %v315, %v316
        %v318 = vrot.slane %v317, 1
        %v319 = vadd.f32 %v317, %v318
        %v320 = vmul.f32 %v319, %v309
        %v321 = vadd.f32 %v320, 1e-05
        %v322 = vrsqrt.pop %v321
        %v323 = vld [vmem:[%s294] sm:$0x1]
        %v324 = vmul.f32 %v322, %v323
        %v325 = vld [vmem:[%s297] sm:$0x1]
        %v326 = vmul.f32 %v310, %v324
        %v327 = vsub.f32 %v325, %v326
        %v328 = vlaneseq
        %v329 = vshrl.u32 %v328, 7
        %v330 = vsub.s32 0, %v329
        %v331 = vrot.slane %v324, %v330
        %v332 = vmul.f32 %v300, %v331
        %v334 = vlaneseq
        %v335 = vshrl.u32 %v334, 7
        %v336 = vsub.s32 0, %v335
        %v337 = vrot.slane %v327, %v336
        %v339 = vadd.f32 %v332, %v337
        %340 = vst.msk [vmem:[%s291] sm:$0xff] %vm301, %v339
        %s341 = sand.u32 %s154, 1
        %s342 = scalar_lea.sflag [#allocation4], %s341
        %s343 = sand.u32 %s154, 1
        %s344 = smul.addr %s343, 8
        %s345 = scalar_lea.vmem [#allocation7], %s344
        // Predicated region
        $region45: #{tpu_custom_call.1} parent=35 // pred_check
          %p346 = pneg %p164
        $region46: #{tpu_custom_call.1} parent=35 // pred_check_branch
          %348 = sbr.rel (%p346) target = $region48
        $region47: #{tpu_custom_call.1} parent=35 // pred_region
          %s350 = ssub.s32 128, 128
          %351 = vsyncadd %s342, %s350
          %s352 = sadd.s32 %s29, %s28
          %s353 = smul.addr %s352, 128
          %s354 = scalar_lea.hbm %s4, %s353
          %s356 = sshll.u32 %s345, 4
          %s357 = int_to_ptr.vmem [resolvable:$true] %s356
          %359 = dma.vmem_to_hbm [thread:$0]  %s357, 128, %s354, %s342
        $region48: #{tpu_custom_call.1} parent=35 // pred_fallthru
          _
      $region36: #{tpu_custom_call.1} parent=5 // pred_fallthru
        _
      %p360 = scmp.le.s32.totalorder 2, %s19
      // Predicated region
      $region49: #{tpu_custom_call.1} parent=5 // pred_check
        %p361 = pneg %p360
      $region50: #{tpu_custom_call.1} parent=5 // pred_check_branch
        %363 = sbr.rel (%p361) target = $region52
      $region51: #{tpu_custom_call.1} parent=5 // pred_region
        %s364 = ssub.s32 %s19, 2
        // Predicated region
        $region53: #{tpu_custom_call.1} parent=51 // pred_check
          %p365 = pneg %p170
        $region54: #{tpu_custom_call.1} parent=51 // pred_check_branch
          %367 = sbr.rel (%p365) target = $region56
        $region55: #{tpu_custom_call.1} parent=51 // pred_region
          %s368 = sand.u32 %s155, 1
          %s369 = scalar_lea.sflag [#allocation4], %s368
          %s370 = sand.u32 %s155, 1
          %s371 = smul.addr %s370, 8
          %s372 = scalar_lea.vmem [#allocation7], %s371
          %373 = dma.done %s369, 128
        $region56: #{tpu_custom_call.1} parent=51 // pred_fallthru
          _
      $region52: #{tpu_custom_call.1} parent=5 // pred_fallthru
        _
    $region6: #{tpu_custom_call.1} parent=1 // loop_footer
      %s23 = sadd.s32 1, %s19
    $region7: #{tpu_custom_call.1} parent=1 // loop_footer_branch
      %18 = sbr.rel target = $region3
    $region8: #{tpu_custom_call.1} parent=1 // loop_exit
      _
    %374 = vsyncpa [#allocation3], 1
    %s375 = scalar_lea.sflag [#allocation3], 1
    %376 = vsyncpa %s375, 1
    %377 = vsyncpa [#allocation6], 1
    %s378 = scalar_lea.sflag [#allocation6], 1
    %379 = vsyncpa %s378, 1
    %380 = vsyncpa [#allocation4], 1
    %s381 = scalar_lea.sflag [#allocation4], 1
    %382 = vsyncpa %s381, 1

</llo_original>
